<compile_context>
chip_gen: v6e
topology: v6e:2x2x1
jax: 0.10.0
libtpu: 0.0.40
codegen_flags: <defaults>
</compile_context>

<pallas_src>
import functools

import jax
import jax.numpy as jnp
from jax import lax
from jax.experimental import pallas as pl
from jax.experimental.pallas import tpu as pltpu

LN_EPS = 1e-5
NEG_SLOPE = 0.01  # torch.nn.functional.leaky_relu default


def _disc_block_kernel(p_ref, w_ref, g_ref, b_ref, o_ref, *, nb, inv_s):
    # p_ref: (nb, K_pad, S_pad)   w_ref: (C_out, K_pad)
    # g_ref/b_ref: (1, S_pad)     o_ref: (nb, C_out, S_pad)
    w = w_ref[...]          # hoisted out of the batch loop
    gamma = g_ref[...]
    beta = b_ref[...]
    for n in range(nb):     # static unroll; nb is 1 (multi-TC) or N (single-TC), both tiny
        # Conv3d as a lane-dense MXU matmul producing (C_out, S_pad) directly.
        y = jnp.dot(w, p_ref[n], preferred_element_type=jnp.float32)
        # LayerNorm over the true S spatial positions.  Padded columns of `y` are
        # exactly zero (zero-padded patches, bias dropped), so single-pass sums over
        # S_pad equal sums over S; divide by the true S.
        s1 = jnp.sum(y, axis=-1, keepdims=True)
        s2 = jnp.sum(y * y, axis=-1, keepdims=True)
        mean = s1 * inv_s
        var = s2 * inv_s - mean * mean
        norm = (y - mean) * lax.rsqrt(var + LN_EPS)
        out = norm * gamma + beta
        # LeakyReLU(0.01) as a single VPU maximum.
        o_ref[n] = jnp.maximum(out, NEG_SLOPE * out)


def _extract_patches(x, kernel, stride):
    """im2col for VALID 3-D conv.  x: (N, C, D, H, W) -> (N, K, S) with K-major order
    (C, kd, kh, kw) matching the flattened PyTorch weight."""
    N, C, D, H, W = x.shape
    kd, kh, kw = kernel
    sd, sh, sw = stride
    Do = (D - kd) // sd + 1
    Ho = (H - kh) // sh + 1
    Wo = (W - kw) // sw + 1
    pieces = []
    for i in range(kd):
        for j in range(kh):
            for k in range(kw):
                pieces.append(
                    x[:, :, i:i + sd * Do:sd, j:j + sh * Ho:sh, k:k + sw * Wo:sw])
    p = jnp.stack(pieces, axis=2)                       # (N, C, kd*kh*kw, Do, Ho, Wo)
    p = p.reshape(N, C * kd * kh * kw, Do * Ho * Wo)    # (N, K, S)
    return p, (Do, Ho, Wo)


def _tensorcores_per_chip():
    """Best-effort detection: v7x exposes 2 TensorCores per chip to one Pallas grid."""
    try:
        kind = jax.devices()[0].device_kind.lower()
    except Exception:
        return 1
    return 2 if ("v7" in kind or "7x" in kind) else 1


def discriminator_block(x, conv_w, conv_b, ln_gamma, ln_beta, kernel, stride):
    """x: (N, C_in, D, H, W); conv_w: (C_out, C_in, kd, kh, kw); conv_b: (C_out,)
    ln_gamma/ln_beta: feature_shape = (Do, Ho, Wo).

    conv_b is accepted for API parity but unused: a per-channel constant is exactly
    cancelled by the LayerNorm mean subtraction over (Do, Ho, Wo)."""
    del conv_b
    N = x.shape[0]
    C_out = conv_w.shape[0]

    patches, (Do, Ho, Wo) = _extract_patches(x, kernel, stride)   # (N, K, S)
    S = Do * Ho * Wo
    K = patches.shape[1]
    S_pad = pl.cdiv(S, 128) * 128   # lane-dense output / unmasked stores
    K_pad = pl.cdiv(K, 8) * 8       # clean sublanes on the contraction dim

    patches = jnp.pad(patches, ((0, 0), (0, K_pad - K), (0, S_pad - S)))
    w_mat = jnp.pad(conv_w.reshape(C_out, K), ((0, 0), (0, K_pad - K)))
    g_mat = jnp.pad(ln_gamma.reshape(1, S), ((0, 0), (0, S_pad - S)))
    b_mat = jnp.pad(ln_beta.reshape(1, S), ((0, 0), (0, S_pad - S)))

    # Grid strategy: one batch element per grid step on 2-TC chips (megacore sharding),
    # whole batch in a single step on single-TC chips (kills per-step overhead).
    nb = 1 if _tensorcores_per_chip() >= 2 else N
    grid = (N // nb,)

    kern = functools.partial(_disc_block_kernel, nb=nb, inv_s=1.0 / float(S))

    out = pl.pallas_call(
        kern,
        out_shape=jax.ShapeDtypeStruct((N, C_out, S_pad), jnp.float32),
        grid_spec=pltpu.PrefetchScalarGridSpec(
            num_scalar_prefetch=0,
            grid=grid,
            in_specs=[
                pl.BlockSpec((nb, K_pad, S_pad), lambda n: (n, 0, 0)),
                pl.BlockSpec((C_out, K_pad), lambda n: (0, 0)),
                pl.BlockSpec((1, S_pad), lambda n: (0, 0)),
                pl.BlockSpec((1, S_pad), lambda n: (0, 0)),
            ],
            out_specs=pl.BlockSpec((nb, C_out, S_pad), lambda n: (n, 0, 0)),
        ),
        compiler_params=pltpu.CompilerParams(
            dimension_semantics=("parallel",)),
    )(patches, w_mat, g_mat, b_mat)

    return out[:, :, :S].reshape(N, C_out, Do, Ho, Wo)


def _reference(x, conv_w, conv_b, ln_gamma, ln_beta, kernel, stride):
    y = lax.conv_general_dilated(
        x, conv_w, window_strides=stride, padding="VALID",
        dimension_numbers=("NCDHW", "OIDHW", "NCDHW"))
    y = y + conv_b.reshape(1, -1, 1, 1, 1)
    mean = jnp.mean(y, axis=(-3, -2, -1), keepdims=True)
    var = jnp.mean((y - mean) ** 2, axis=(-3, -2, -1), keepdims=True)
    y = (y - mean) / jnp.sqrt(var + LN_EPS)
    y = y * ln_gamma[None, None] + ln_beta[None, None]
    return jnp.where(y >= 0, y, NEG_SLOPE * y)


if __name__ == "__main__":
    # Module hyperparameters (small, shapes consistent with Conv3d + LayerNorm)
    in_dim, out_dim = 4, 8
    kernel = (3, 3, 3)
    stride = (1, 1, 1)
    N, D, H, W = 2, 8, 8, 8
    Do, Ho, Wo = 6, 6, 6
    feature_shape = (Do, Ho, Wo)

    key = jax.random.PRNGKey(0)
    kx, kw, kb, kg, kbeta = jax.random.split(key, 5)

    x = jax.random.normal(kx, (N, in_dim, D, H, W), dtype=jnp.float32)
    conv_w = 0.1 * jax.random.normal(kw, (out_dim, in_dim) + kernel, dtype=jnp.float32)
    conv_b = 0.1 * jax.random.normal(kb, (out_dim,), dtype=jnp.float32)
    # Non-trivial affine params to exercise the gamma/beta path.
    ln_gamma = 1.0 + 0.1 * jax.random.normal(kg, feature_shape, dtype=jnp.float32)
    ln_beta = 0.1 * jax.random.normal(kbeta, feature_shape, dtype=jnp.float32)

    out = discriminator_block(x, conv_w, conv_b, ln_gamma, ln_beta, kernel, stride)
    out = jax.block_until_ready(out)

    ref = _reference(x, conv_w, conv_b, ln_gamma, ln_beta, kernel, stride)
    assert out.shape == (N, out_dim, Do, Ho, Wo)
    assert jnp.allclose(out, ref, atol=1e-4, rtol=1e-4), "mismatch vs reference"

    print("KERNEL_OK")
</pallas_src>

<mosaic_0001>
module attributes {stable_mosaic.version = 11 : i64} {
  func.func @_disc_block_kernel(%arg0: i32, %arg1: memref<2x112x256xf32, #tpu.memory_space<vmem>>, %arg2: memref<8x112xf32, #tpu.memory_space<vmem>>, %arg3: memref<1x256xf32, #tpu.memory_space<vmem>>, %arg4: memref<1x256xf32, #tpu.memory_space<vmem>>, %arg5: memref<2x8x256xf32, #tpu.memory_space<vmem>>) attributes {dimension_semantics = [#tpu.dimension_semantics<parallel>], iteration_bounds = array<i64: 1>, scalar_prefetch = 0 : i64, scratch_operands = 0 : i64, tpu.core_type = #tpu.core_type<tc>, window_params = [{transform_indices = @transform_0, window_bounds = array<i64: 2, 112, 256>}, {pipeline_mode = #tpu.pipeline_mode<synchronous>, transform_indices = @transform_1, window_bounds = array<i64: 8, 112>}, {pipeline_mode = #tpu.pipeline_mode<synchronous>, transform_indices = @transform_2, window_bounds = array<i64: 1, 256>}, {pipeline_mode = #tpu.pipeline_mode<synchronous>, transform_indices = @transform_3, window_bounds = array<i64: 1, 256>}, {transform_indices = @transform_4, window_bounds = array<i64: 2, 8, 256>}]} {
    %c0 = arith.constant 0 : index
    %c0_0 = arith.constant 0 : index
    %0 = vector.load %arg2[%c0, %c0_0] : memref<8x112xf32, #tpu.memory_space<vmem>>, vector<8x112xf32>
    %c0_1 = arith.constant 0 : index
    %c0_2 = arith.constant 0 : index
    %1 = vector.load %arg3[%c0_1, %c0_2] : memref<1x256xf32, #tpu.memory_space<vmem>>, vector<1x256xf32>
    %c0_3 = arith.constant 0 : index
    %c0_4 = arith.constant 0 : index
    %2 = vector.load %arg4[%c0_3, %c0_4] : memref<1x256xf32, #tpu.memory_space<vmem>>, vector<1x256xf32>
    %c0_5 = arith.constant 0 : index
    %c0_6 = arith.constant 0 : index
    %c0_7 = arith.constant 0 : index
    %3 = vector.load %arg1[%c0_5, %c0_6, %c0_7] : memref<2x112x256xf32, #tpu.memory_space<vmem>>, vector<1x112x256xf32>
    %4 = vector.shape_cast %3 : vector<1x112x256xf32> to vector<112x256xf32>
    %cst = arith.constant dense<0.000000e+00> : vector<8x256xf32>
    %5 = tpu.matmul %0, %4, %cst {dimension_numbers = #tpu.dot_dimension_numbers<[1], [0], [0], [1], [0, 0, 1, 1], [], []>} : vector<8x112xf32>, vector<112x256xf32>, vector<8x256xf32> -> vector<8x256xf32>
    %cst_8 = arith.constant dense<0.000000e+00> : vector<8xf32>
    %6 = vector.multi_reduction <add>, %5, %cst_8 [1] : vector<8x256xf32> to vector<8xf32>
    %7 = vector.shape_cast %6 : vector<8xf32> to vector<8x1xf32>
    %8 = arith.mulf %5, %5 : vector<8x256xf32>
    %cst_9 = arith.constant dense<0.000000e+00> : vector<8xf32>
    %9 = vector.multi_reduction <add>, %8, %cst_9 [1] : vector<8x256xf32> to vector<8xf32>
    %10 = vector.shape_cast %9 : vector<8xf32> to vector<8x1xf32>
    %cst_10 = arith.constant 0.00462962966 : f32
    %11 = vector.broadcast %cst_10 : f32 to vector<8x1xf32>
    %12 = arith.mulf %7, %11 : vector<8x1xf32>
    %cst_11 = arith.constant 0.00462962966 : f32
    %13 = vector.broadcast %cst_11 : f32 to vector<8x1xf32>
    %14 = arith.mulf %10, %13 : vector<8x1xf32>
    %15 = arith.mulf %12, %12 : vector<8x1xf32>
    %16 = arith.subf %14, %15 : vector<8x1xf32>
    %17 = vector.broadcast %12 : vector<8x1xf32> to vector<8x256xf32>
    %18 = arith.subf %5, %17 : vector<8x256xf32>
    %cst_12 = arith.constant 9.99999974E-6 : f32
    %19 = vector.broadcast %cst_12 : f32 to vector<8x1xf32>
    %20 = arith.addf %16, %19 : vector<8x1xf32>
    %21 = math.rsqrt %20 : vector<8x1xf32>
    %22 = vector.broadcast %21 : vector<8x1xf32> to vector<8x256xf32>
    %23 = arith.mulf %18, %22 : vector<8x256xf32>
    %24 = vector.broadcast %1 : vector<1x256xf32> to vector<8x256xf32>
    %25 = arith.mulf %23, %24 : vector<8x256xf32>
    %26 = vector.broadcast %2 : vector<1x256xf32> to vector<8x256xf32>
    %27 = arith.addf %25, %26 : vector<8x256xf32>
    %cst_13 = arith.constant 0.00999999977 : f32
    %28 = vector.broadcast %cst_13 : f32 to vector<8x256xf32>
    %29 = arith.mulf %28, %27 : vector<8x256xf32>
    %30 = arith.maximumf %27, %29 : vector<8x256xf32>
    %c0_14 = arith.constant 0 : index
    %c0_15 = arith.constant 0 : index
    %c0_16 = arith.constant 0 : index
    %31 = vector.load %arg5[%c0_14, %c0_15, %c0_16] : memref<2x8x256xf32, #tpu.memory_space<vmem>>, vector<1x8x256xf32>
    %32 = vector.shape_cast %31 : vector<1x8x256xf32> to vector<8x256xf32>
    %33 = vector.shape_cast %30 : vector<8x256xf32> to vector<1x8x256xf32>
    tpu.vector_store %arg5[%c0_14, %c0_15, %c0_16], %33 {strides = array<i32>} : memref<2x8x256xf32, #tpu.memory_space<vmem>>, vector<1x8x256xf32>,
    %c1 = arith.constant 1 : index
    %c0_17 = arith.constant 0 : index
    %c0_18 = arith.constant 0 : index
    %34 = vector.load %arg1[%c1, %c0_17, %c0_18] : memref<2x112x256xf32, #tpu.memory_space<vmem>>, vector<1x112x256xf32>
    %35 = vector.shape_cast %34 : vector<1x112x256xf32> to vector<112x256xf32>
    %cst_19 = arith.constant dense<0.000000e+00> : vector<8x256xf32>
    %36 = tpu.matmul %0, %35, %cst_19 {dimension_numbers = #tpu.dot_dimension_numbers<[1], [0], [0], [1], [0, 0, 1, 1], [], []>} : vector<8x112xf32>, vector<112x256xf32>, vector<8x256xf32> -> vector<8x256xf32>
    %cst_20 = arith.constant dense<0.000000e+00> : vector<8xf32>
    %37 = vector.multi_reduction <add>, %36, %cst_20 [1] : vector<8x256xf32> to vector<8xf32>
    %38 = vector.shape_cast %37 : vector<8xf32> to vector<8x1xf32>
    %39 = arith.mulf %36, %36 : vector<8x256xf32>
    %cst_21 = arith.constant dense<0.000000e+00> : vector<8xf32>
    %40 = vector.multi_reduction <add>, %39, %cst_21 [1] : vector<8x256xf32> to vector<8xf32>
    %41 = vector.shape_cast %40 : vector<8xf32> to vector<8x1xf32>
    %cst_22 = arith.constant 0.00462962966 : f32
    %42 = vector.broadcast %cst_22 : f32 to vector<8x1xf32>
    %43 = arith.mulf %38, %42 : vector<8x1xf32>
    %cst_23 = arith.constant 0.00462962966 : f32
    %44 = vector.broadcast %cst_23 : f32 to vector<8x1xf32>
    %45 = arith.mulf %41, %44 : vector<8x1xf32>
    %46 = arith.mulf %43, %43 : vector<8x1xf32>
    %47 = arith.subf %45, %46 : vector<8x1xf32>
    %48 = vector.broadcast %43 : vector<8x1xf32> to vector<8x256xf32>
    %49 = arith.subf %36, %48 : vector<8x256xf32>
    %cst_24 = arith.constant 9.99999974E-6 : f32
    %50 = vector.broadcast %cst_24 : f32 to vector<8x1xf32>
    %51 = arith.addf %47, %50 : vector<8x1xf32>
    %52 = math.rsqrt %51 : vector<8x1xf32>
    %53 = vector.broadcast %52 : vector<8x1xf32> to vector<8x256xf32>
    %54 = arith.mulf %49, %53 : vector<8x256xf32>
    %55 = vector.broadcast %1 : vector<1x256xf32> to vector<8x256xf32>
    %56 = arith.mulf %54, %55 : vector<8x256xf32>
    %57 = vector.broadcast %2 : vector<1x256xf32> to vector<8x256xf32>
    %58 = arith.addf %56, %57 : vector<8x256xf32>
    %cst_25 = arith.constant 0.00999999977 : f32
    %59 = vector.broadcast %cst_25 : f32 to vector<8x256xf32>
    %60 = arith.mulf %59, %58 : vector<8x256xf32>
    %61 = arith.maximumf %58, %60 : vector<8x256xf32>
    %c1_26 = arith.constant 1 : index
    %c0_27 = arith.constant 0 : index
    %c0_28 = arith.constant 0 : index
    %62 = vector.load %arg5[%c1_26, %c0_27, %c0_28] : memref<2x8x256xf32, #tpu.memory_space<vmem>>, vector<1x8x256xf32>
    %63 = vector.shape_cast %62 : vector<1x8x256xf32> to vector<8x256xf32>
    %64 = vector.shape_cast %61 : vector<8x256xf32> to vector<1x8x256xf32>
    tpu.vector_store %arg5[%c1_26, %c0_27, %c0_28], %64 {strides = array<i32>} : memref<2x8x256xf32, #tpu.memory_space<vmem>>, vector<1x8x256xf32>,
    return
  }
  func.func @transform_0(%arg0: i32) -> (i32, i32, i32) {
    %c0_i32 = arith.constant 0 : i32
    %c0_i32_0 = arith.constant 0 : i32
    %c0_i32_1 = arith.constant 0 : i32
    return %arg0, %c0_i32, %c0_i32_0 : i32, i32, i32
  }
  func.func @transform_1(%arg0: i32) -> (i32, i32) {
    %c0_i32 = arith.constant 0 : i32
    %c0_i32_0 = arith.constant 0 : i32
    %c0_i32_1 = arith.constant 0 : i32
    return %c0_i32, %c0_i32_0 : i32, i32
  }
  func.func @transform_2(%arg0: i32) -> (i32, i32) {
    %c0_i32 = arith.constant 0 : i32
    %c0_i32_0 = arith.constant 0 : i32
    %c0_i32_1 = arith.constant 0 : i32
    return %c0_i32, %c0_i32_0 : i32, i32
  }
  func.func @transform_3(%arg0: i32) -> (i32, i32) {
    %c0_i32 = arith.constant 0 : i32
    %c0_i32_0 = arith.constant 0 : i32
    %c0_i32_1 = arith.constant 0 : i32
    return %c0_i32, %c0_i32_0 : i32, i32
  }
  func.func @transform_4(%arg0: i32) -> (i32, i32, i32) {
    %c0_i32 = arith.constant 0 : i32
    %c0_i32_0 = arith.constant 0 : i32
    %c0_i32_1 = arith.constant 0 : i32
    return %arg0, %c0_i32, %c0_i32_0 : i32, i32, i32
  }
}

</mosaic_0001>

<llo_original>
// kernel: tpu_custom_call.1
$region0: #{tpu_custom_call.1}
  #allocation0 [shape = 'u32[]', space=smem, size = 0x4, offset = 0x4, fixed_abs, tag = 'smem constant byte address 0x4 - core index']
  #allocation1 [shape = 'u32[144,128]{1,0:T(1,128)}', space=vmem, size = 0x12000, scoped, tag = 'internal scratch']
  %s0 = inlined_call_operand.hbm [shape: f32[2,112,256], index: 0, kind: input, shape index: {}]
  %s1 = inlined_call_operand.hbm [shape: f32[8,112], index: 1, kind: input, shape index: {}]
  %s2 = inlined_call_operand.vmem [shape: f32[1,256], index: 2, kind: input, shape index: {}]
  %s3 = inlined_call_operand.vmem [shape: f32[1,256], index: 3, kind: input, shape index: {}]
  %s4 = inlined_call_operand.hbm [shape: f32[2,8,256], index: 4, kind: output, shape index: {}]
  %s5 = sld [smem:[#allocation0]]
  $region34: #{tpu_custom_call.1} parent=0
    _
  %s7 = ssub.s32 1, %s5
  %s8 = scalar_select 0, %s7, %s5
  $region1: #{tpu_custom_call.1} parent=0
    #allocation2 [shape = 'u8[229376]{0}', space=vmem, size = 0x38000, scoped, tag = 'input window, operand 0, single buffered']
    #allocation3 [shape = 's32[1]{0}', space=sflag, size = 0x4, scoped, tag = 'scoped memory for tpu_custom_call.1']
    #allocation4 [shape = 's32[1]{0}', space=sflag, size = 0x4, scoped, tag = 'scoped memory for tpu_custom_call.1']
    #allocation5 [shape = 'u8[4096]{0}', space=vmem, size = 0x1000, scoped, tag = 'input window, operand 1, single buffered']
    #allocation6 [shape = 's32[1]{0}', space=sflag, size = 0x4, scoped, tag = 'scoped memory for tpu_custom_call.1']
    #allocation7 [shape = 'u8[16384]{0}', space=vmem, size = 0x4000, scoped, tag = 'output window, operand 0, single buffered']
    %9 = vsyncpa [#allocation3], 0
    %10 = vsyncpa [#allocation6], 0
    %11 = vsyncpa [#allocation4], 0
    // Predicated region
    $region2: #{tpu_custom_call.1} parent=1 // pred_check
      _
    $region3: #{tpu_custom_call.1} parent=1 // pred_check_branch
      %13 = sbr.rel (0) target = $region5
    $region4: #{tpu_custom_call.1} parent=1 // pred_region
      %s15 = ssub.s32 7168, 7168
      %16 = vsyncadd [#allocation3], %s15
      %s17 = sshll.u32 [#allocation2], 4
      %s18 = int_to_ptr.vmem [resolvable:$true] %s17
      %23 = dma.hbm_to_vmem [thread:$0]  %s0, 7168, %s18, [#allocation3], 256, 256, 16
    $region5: #{tpu_custom_call.1} parent=1 // pred_fallthru
      _
    // Predicated region
    $region6: #{tpu_custom_call.1} parent=1 // pred_check
      _
    $region7: #{tpu_custom_call.1} parent=1 // pred_check_branch
      %25 = sbr.rel (0) target = $region9
    $region8: #{tpu_custom_call.1} parent=1 // pred_region
      %s27 = ssub.s32 128, 128
      %28 = vsyncadd [#allocation6], %s27
      %s30 = sshll.u32 [#allocation5], 4
      %s31 = int_to_ptr.vmem [resolvable:$true] %s30
      %33 = dma.hbm_to_vmem [thread:$0]  %s1, 128, %s31, [#allocation6]
    $region9: #{tpu_custom_call.1} parent=1 // pred_fallthru
      _
    // Predicated region
    $region10: #{tpu_custom_call.1} parent=1 // pred_check
      _
    $region11: #{tpu_custom_call.1} parent=1 // pred_check_branch
      %35 = sbr.rel (0) target = $region13
    $region12: #{tpu_custom_call.1} parent=1 // pred_region
      _
    $region13: #{tpu_custom_call.1} parent=1 // pred_fallthru
      _
    // Predicated region
    $region14: #{tpu_custom_call.1} parent=1 // pred_check
      _
    $region15: #{tpu_custom_call.1} parent=1 // pred_check_branch
      %37 = sbr.rel (0) target = $region17
    $region16: #{tpu_custom_call.1} parent=1 // pred_region
      _
    $region17: #{tpu_custom_call.1} parent=1 // pred_fallthru
      _
    // Predicated region
    $region18: #{tpu_custom_call.1} parent=1 // pred_check
      _
    $region19: #{tpu_custom_call.1} parent=1 // pred_check_branch
      %39 = sbr.rel (0) target = $region21
    $region20: #{tpu_custom_call.1} parent=1 // pred_region
      %40 = dma.done [#allocation3], 7168
    $region21: #{tpu_custom_call.1} parent=1 // pred_fallthru
      _
    // Predicated region
    $region22: #{tpu_custom_call.1} parent=1 // pred_check
      _
    $region23: #{tpu_custom_call.1} parent=1 // pred_check_branch
      %42 = sbr.rel (0) target = $region25
    $region24: #{tpu_custom_call.1} parent=1 // pred_region
      %43 = dma.done [#allocation6], 128
    $region25: #{tpu_custom_call.1} parent=1 // pred_fallthru
      _
    %v44 = vld [vmem:[#allocation5] sm:$0xff]
    %v45 = vld [vmem:[%s2] sm:$0x3]
    %v46 = vld [vmem:[%s3] sm:$0x3]
    %v47 = vld [vmem:[#allocation2] sm:$0xff]
    %v48 = vld [vmem:[#allocation2 + $0x8] sm:$0xff]
    %v49 = vld [vmem:[#allocation2 + $0x10] sm:$0xff]
    %v50 = vld [vmem:[#allocation2 + $0x18] sm:$0xff]
    %v51 = vld [vmem:[#allocation2 + $0x20] sm:$0xff]
    %v52 = vld [vmem:[#allocation2 + $0x28] sm:$0xff]
    %v53 = vld [vmem:[#allocation2 + $0x30] sm:$0xff]
    %v54 = vld [vmem:[#allocation2 + $0x38] sm:$0xff]
    %v55 = vld [vmem:[#allocation2 + $0x40] sm:$0xff]
    %v56 = vld [vmem:[#allocation2 + $0x48] sm:$0xff]
    %v57 = vld [vmem:[#allocation2 + $0x50] sm:$0xff]
    %v58 = vld [vmem:[#allocation2 + $0x58] sm:$0xff]
    %v59 = vld [vmem:[#allocation2 + $0x60] sm:$0xff]
    %v60 = vld [vmem:[#allocation2 + $0x68] sm:$0xff]
    %v61 = vld [vmem:[#allocation2 + $0x70] sm:$0xff]
    %v62 = vld [vmem:[#allocation2 + $0x78] sm:$0xff]
    %v63 = vld [vmem:[#allocation2 + $0x80] sm:$0xff]
    %v64 = vld [vmem:[#allocation2 + $0x88] sm:$0xff]
    %v65 = vld [vmem:[#allocation2 + $0x90] sm:$0xff]
    %v66 = vld [vmem:[#allocation2 + $0x98] sm:$0xff]
    %v67 = vld [vmem:[#allocation2 + $0xa0] sm:$0xff]
    %v68 = vld [vmem:[#allocation2 + $0xa8] sm:$0xff]
    %v69 = vld [vmem:[#allocation2 + $0xb0] sm:$0xff]
    %v70 = vld [vmem:[#allocation2 + $0xb8] sm:$0xff]
    %v71 = vld [vmem:[#allocation2 + $0xc0] sm:$0xff]
    %v72 = vld [vmem:[#allocation2 + $0xc8] sm:$0xff]
    %v73 = vld [vmem:[#allocation2 + $0xd0] sm:$0xff]
    %v74 = vld [vmem:[#allocation2 + $0xd8] sm:$0xff]
    %vm75 = vcmask 916480
    %v77 = vsel %vm75, %v44, 0
    %79 = vmatprep.subr.mxu0 0.0
    %80 = vmatpush1.msra.mxu0 0.0
    %81 = vmatprep.subr.mxu0 0.0
    %82 = vmatpush1.msra.mxu0 0.0
    %83 = vmatprep.subr.mxu0 %v74
    %84 = vmatpush1.msra.mxu0 %v73
    %85 = vmatprep.subr.mxu0 %v72
    %86 = vmatpush1.msra.mxu0 %v71
    %87 = vmatprep.subr.mxu0 %v70
    %88 = vmatpush1.msra.mxu0 %v69
    %89 = vmatprep.subr.mxu0 %v68
    %90 = vmatpush1.msra.mxu0 %v67
    %91 = vmatprep.subr.mxu0 %v66
    %92 = vmatpush1.msra.mxu0 %v65
    %93 = vmatprep.subr.mxu0 %v64
    %94 = vmatpush1.msra.mxu0 %v63
    %95 = vmatprep.subr.mxu0 %v62
    %96 = vmatpush1.msra.mxu0 %v61
    %97 = vmatprep.subr.mxu0 %v60
    %98 = vmatpush1.msra.mxu0 %v59
    %99 = vmatprep.subr.mxu0 %v58
    %100 = vmatpush1.msra.mxu0 %v57
    %101 = vmatprep.subr.mxu0 %v56
    %102 = vmatpush1.msra.mxu0 %v55
    %103 = vmatprep.subr.mxu0 %v54
    %104 = vmatpush1.msra.mxu0 %v53
    %105 = vmatprep.subr.mxu0 %v52
    %106 = vmatpush1.msra.mxu0 %v51
    %107 = vmatprep.subr.mxu0 %v50
    %108 = vmatpush1.msra.mxu0 %v49
    %109 = vmatprep.subr.mxu0 %v48
    %110 = vmatpush1.msra.mxu0 %v47
    %111 = vmatprep.subr.mxu0 0.0
    %112 = vmatpush2.msra.mxu0 0.0
    %113 = vmatprep.subr.mxu0 0.0
    %114 = vmatpush2.msra.mxu0 0.0
    %115 = vmatprep.subr.mxu0 0.0
    %116 = vmatpush2.msra.mxu0 0.0
    %117 = vmatprep.subr.mxu0 0.0
    %118 = vmatpush2.msra.mxu0 0.0
    %119 = vmatprep.subr.mxu0 0.0
    %120 = vmatpush2.msra.mxu0 0.0
    %121 = vmatprep.subr.mxu0 0.0
    %122 = vmatpush2.msra.mxu0 0.0
    %123 = vmatprep.subr.mxu0 0.0
    %124 = vmatpush2.msra.mxu0 0.0
    %125 = vmatprep.subr.mxu0 0.0
    %126 = vmatpush2.msra.mxu0 0.0
    %127 = vmatprep.subr.mxu0 0.0
    %128 = vmatpush2.msra.mxu0 0.0
    %129 = vmatprep.subr.mxu0 0.0
    %130 = vmatpush2.msra.mxu0 0.0
    %131 = vmatprep.subr.mxu0 0.0
    %132 = vmatpush2.msra.mxu0 0.0
    %133 = vmatprep.subr.mxu0 0.0
    %134 = vmatpush2.msra.mxu0 0.0
    %135 = vmatprep.subr.mxu0 0.0
    %136 = vmatpush2.msra.mxu0 0.0
    %137 = vmatprep.subr.mxu0 0.0
    %138 = vmatpush2.msra.mxu0 0.0
    %139 = vmatprep.subr.mxu0 0.0
    %140 = vmatpush2.msra.mxu0 0.0
    %141 = vmatprep.subr.mxu0 0.0
    %142 = vmatpush2.msra.mxu0 0.0
    %143 = vmatprep.mubr.f32.mxu0 0.0
    %144 = vmatmul.mubr.f32.gmra.mxu0 %v77
    %v145 = vpop.f32.mrf.mxu0
    %v146 = vadd.f32 0.0, %v145
    %v147 = vpop.f32.mrf.mxu0
    %v148 = vadd.f32 0.0, %v147
    %149 = vdwg.mxu0
    %v150 = vadd.f32 %v146, %v148
    %151 = vadd.xlane.f32.xlu0 %v150
    %v152 = vpop.xlane.xlu0 %151
    %v153 = vmul.f32 %v146, %v146
    %v154 = vmul.f32 %v148, %v148
    %v155 = vadd.f32 %v153, %v154
    %156 = vadd.xlane.f32.xlu0 %v155
    %v157 = vpop.xlane.xlu0 %156
    %v158 = vmul.f32 %v152, 0.0046296297
    %v159 = vmul.f32 %v157, 0.0046296297
    %v160 = vmul.f32 %v158, %v158
    %v161 = vsub.f32 %v159, %v160
    %v162 = vsub.f32 %v146, %v158
    %v163 = vsub.f32 %v148, %v158
    %v164 = vadd.f32 %v161, 1e-05
    %v165 = vrsqrt.pop %v164
    %v166 = vmul.f32 %v162, %v165
    %v167 = vmul.f32 %v163, %v165
    %v169 = vlaneseq
    %v170 = vshrl.u32 %v169, 7
    %v171 = vsub.s32 0, %v170
    %v172 = vrot.slane %v45, %v171
    %v173 = vlaneseq
    %v174 = vshrl.u32 %v173, 7
    %v175 = vsub.s32 1, %v174
    %v176 = vrot.slane %v45, %v175
    %v179 = vmul.f32 %v166, %v172
    %v180 = vmul.f32 %v167, %v176
    %v182 = vlaneseq
    %v183 = vshrl.u32 %v182, 7
    %v184 = vsub.s32 0, %v183
    %v185 = vrot.slane %v46, %v184
    %v186 = vlaneseq
    %v187 = vshrl.u32 %v186, 7
    %v188 = vsub.s32 1, %v187
    %v189 = vrot.slane %v46, %v188
    %v192 = vadd.f32 %v179, %v185
    %v193 = vadd.f32 %v180, %v189
    %v194 = vmul.f32 %v192, 0.01
    %v195 = vmul.f32 %v193, 0.01
    %v196 = vmax.f32 %v192, %v194
    %v197 = vmax.f32 %v193, %v195
    %198 = vst [vmem:[#allocation7] sm:$0xff] %v196
    %199 = vst [vmem:[#allocation7 + $0x8] sm:$0xff] %v197
    %s200 = scalar_lea.vmem [#allocation2], 224
    %v201 = vld [vmem:[%s200] sm:$0xff]
    %v202 = vld [vmem:[%s200 + $0x8] sm:$0xff]
    %v203 = vld [vmem:[%s200 + $0x10] sm:$0xff]
    %v204 = vld [vmem:[%s200 + $0x18] sm:$0xff]
    %v205 = vld [vmem:[%s200 + $0x20] sm:$0xff]
    %v206 = vld [vmem:[%s200 + $0x28] sm:$0xff]
    %v207 = vld [vmem:[%s200 + $0x30] sm:$0xff]
    %v208 = vld [vmem:[%s200 + $0x38] sm:$0xff]
    %v209 = vld [vmem:[%s200 + $0x40] sm:$0xff]
    %v210 = vld [vmem:[%s200 + $0x48] sm:$0xff]
    %v211 = vld [vmem:[%s200 + $0x50] sm:$0xff]
    %v212 = vld [vmem:[%s200 + $0x58] sm:$0xff]
    %v213 = vld [vmem:[%s200 + $0x60] sm:$0xff]
    %v214 = vld [vmem:[%s200 + $0x68] sm:$0xff]
    %v215 = vld [vmem:[%s200 + $0x70] sm:$0xff]
    %v216 = vld [vmem:[%s200 + $0x78] sm:$0xff]
    %v217 = vld [vmem:[%s200 + $0x80] sm:$0xff]
    %v218 = vld [vmem:[%s200 + $0x88] sm:$0xff]
    %v219 = vld [vmem:[%s200 + $0x90] sm:$0xff]
    %v220 = vld [vmem:[%s200 + $0x98] sm:$0xff]
    %v221 = vld [vmem:[%s200 + $0xa0] sm:$0xff]
    %v222 = vld [vmem:[%s200 + $0xa8] sm:$0xff]
    %v223 = vld [vmem:[%s200 + $0xb0] sm:$0xff]
    %v224 = vld [vmem:[%s200 + $0xb8] sm:$0xff]
    %v225 = vld [vmem:[%s200 + $0xc0] sm:$0xff]
    %v226 = vld [vmem:[%s200 + $0xc8] sm:$0xff]
    %v227 = vld [vmem:[%s200 + $0xd0] sm:$0xff]
    %v228 = vld [vmem:[%s200 + $0xd8] sm:$0xff]
    %229 = vmatprep.subr.mxu0 0.0
    %230 = vmatpush1.msra.mxu0 0.0
    %231 = vmatprep.subr.mxu0 0.0
    %232 = vmatpush1.msra.mxu0 0.0
    %233 = vmatprep.subr.mxu0 %v228
    %234 = vmatpush1.msra.mxu0 %v227
    %235 = vmatprep.subr.mxu0 %v226
    %236 = vmatpush1.msra.mxu0 %v225
    %237 = vmatprep.subr.mxu0 %v224
    %238 = vmatpush1.msra.mxu0 %v223
    %239 = vmatprep.subr.mxu0 %v222
    %240 = vmatpush1.msra.mxu0 %v221
    %241 = vmatprep.subr.mxu0 %v220
    %242 = vmatpush1.msra.mxu0 %v219
    %243 = vmatprep.subr.mxu0 %v218
    %244 = vmatpush1.msra.mxu0 %v217
    %245 = vmatprep.subr.mxu0 %v216
    %246 = vmatpush1.msra.mxu0 %v215
    %247 = vmatprep.subr.mxu0 %v214
    %248 = vmatpush1.msra.mxu0 %v213
    %249 = vmatprep.subr.mxu0 %v212
    %250 = vmatpush1.msra.mxu0 %v211
    %251 = vmatprep.subr.mxu0 %v210
    %252 = vmatpush1.msra.mxu0 %v209
    %253 = vmatprep.subr.mxu0 %v208
    %254 = vmatpush1.msra.mxu0 %v207
    %255 = vmatprep.subr.mxu0 %v206
    %256 = vmatpush1.msra.mxu0 %v205
    %257 = vmatprep.subr.mxu0 %v204
    %258 = vmatpush1.msra.mxu0 %v203
    %259 = vmatprep.subr.mxu0 %v202
    %260 = vmatpush1.msra.mxu0 %v201
    %261 = vmatprep.subr.mxu0 0.0
    %262 = vmatpush2.msra.mxu0 0.0
    %263 = vmatprep.subr.mxu0 0.0
    %264 = vmatpush2.msra.mxu0 0.0
    %265 = vmatprep.subr.mxu0 0.0
    %266 = vmatpush2.msra.mxu0 0.0
    %267 = vmatprep.subr.mxu0 0.0
    %268 = vmatpush2.msra.mxu0 0.0
    %269 = vmatprep.subr.mxu0 0.0
    %270 = vmatpush2.msra.mxu0 0.0
    %271 = vmatprep.subr.mxu0 0.0
    %272 = vmatpush2.msra.mxu0 0.0
    %273 = vmatprep.subr.mxu0 0.0
    %274 = vmatpush2.msra.mxu0 0.0
    %275 = vmatprep.subr.mxu0 0.0
    %276 = vmatpush2.msra.mxu0 0.0
    %277 = vmatprep.subr.mxu0 0.0
    %278 = vmatpush2.msra.mxu0 0.0
    %279 = vmatprep.subr.mxu0 0.0
    %280 = vmatpush2.msra.mxu0 0.0
    %281 = vmatprep.subr.mxu0 0.0
    %282 = vmatpush2.msra.mxu0 0.0
    %283 = vmatprep.subr.mxu0 0.0
    %284 = vmatpush2.msra.mxu0 0.0
    %285 = vmatprep.subr.mxu0 0.0
    %286 = vmatpush2.msra.mxu0 0.0
    %287 = vmatprep.subr.mxu0 0.0
    %288 = vmatpush2.msra.mxu0 0.0
    %289 = vmatprep.subr.mxu0 0.0
    %290 = vmatpush2.msra.mxu0 0.0
    %291 = vmatprep.subr.mxu0 0.0
    %292 = vmatpush2.msra.mxu0 0.0
    %293 = vmatprep.mubr.f32.mxu0 0.0
    %294 = vmatmul.mubr.f32.gmra.mxu0 %v77
    %v295 = vpop.f32.mrf.mxu0
    %v296 = vadd.f32 0.0, %v295
    %v297 = vpop.f32.mrf.mxu0
    %v298 = vadd.f32 0.0, %v297
    %299 = vdwg.mxu0
    %v300 = vadd.f32 %v296, %v298
    %301 = vadd.xlane.f32.xlu0 %v300
    %v302 = vpop.xlane.xlu0 %301
    %v303 = vmul.f32 %v296, %v296
    %v304 = vmul.f32 %v298, %v298
    %v305 = vadd.f32 %v303, %v304
    %306 = vadd.xlane.f32.xlu0 %v305
    %v307 = vpop.xlane.xlu0 %306
    %v308 = vmul.f32 %v302, 0.0046296297
    %v309 = vmul.f32 %v307, 0.0046296297
    %v310 = vmul.f32 %v308, %v308
    %v311 = vsub.f32 %v309, %v310
    %v312 = vsub.f32 %v296, %v308
    %v313 = vsub.f32 %v298, %v308
    %v314 = vadd.f32 %v311, 1e-05
    %v315 = vrsqrt.pop %v314
    %v316 = vmul.f32 %v312, %v315
    %v317 = vmul.f32 %v313, %v315
    %v318 = vmul.f32 %v316, %v172
    %v319 = vmul.f32 %v317, %v176
    %v320 = vadd.f32 %v318, %v185
    %v321 = vadd.f32 %v319, %v189
    %v322 = vmul.f32 %v320, 0.01
    %v323 = vmul.f32 %v321, 0.01
    %v324 = vmax.f32 %v320, %v322
    %v325 = vmax.f32 %v321, %v323
    %s326 = scalar_lea.vmem [#allocation7], 16
    %327 = vst [vmem:[%s326] sm:$0xff] %v324
    %328 = vst [vmem:[%s326 + $0x8] sm:$0xff] %v325
    // Predicated region
    $region26: #{tpu_custom_call.1} parent=1 // pred_check
      _
    $region27: #{tpu_custom_call.1} parent=1 // pred_check_branch
      %330 = sbr.rel (0) target = $region29
    $region28: #{tpu_custom_call.1} parent=1 // pred_region
      %s332 = ssub.s32 512, 512
      %333 = vsyncadd [#allocation4], %s332
      %s334 = sshll.u32 [#allocation7], 4
      %s335 = int_to_ptr.vmem [resolvable:$true] %s334
      %340 = dma.vmem_to_hbm [thread:$0]  %s335, 512, %s4, [#allocation4], 256, 256, 16
    $region29: #{tpu_custom_call.1} parent=1 // pred_fallthru
      _
    // Predicated region
    $region30: #{tpu_custom_call.1} parent=1 // pred_check
      _
    $region31: #{tpu_custom_call.1} parent=1 // pred_check_branch
      %342 = sbr.rel (0) target = $region33
    $region32: #{tpu_custom_call.1} parent=1 // pred_region
      %343 = dma.done [#allocation4], 512
    $region33: #{tpu_custom_call.1} parent=1 // pred_fallthru
      _
    %344 = vsyncpa [#allocation3], 1
    %345 = vsyncpa [#allocation6], 1
    %346 = vsyncpa [#allocation4], 1

</llo_original>
